<compile_context>
chip_gen: v6e
topology: v6e:2x2x1
jax: 0.10.0
libtpu: 0.0.40
codegen_flags: <defaults>
</compile_context>

<pallas_src>
import functools

import jax
import jax.numpy as jnp
from jax.experimental import pallas as pl
from jax.experimental.pallas import tpu as pltpu


# ----------------------------- kernels --------------------------------------


def _scatter_col_lane_dense_kernel(vp_ref, col_ref, out_ref, *, idx, p):
    """Lane-dense path.

    vp_ref / out_ref : VMEM (tile_rows, 128) slab tiles of the row-major (N, P)
                       table reshaped to (N*P/128, 128).
    col_ref          : VMEM (tile_rows, 128//p); col[s, j] is the clamped value
                       for original row s*(128//p) + j, whose slab slot is lane
                       j*p + idx of slab row s.
    """
    rpb = 128 // p
    lane = jax.lax.broadcasted_iota(jnp.int32, (1, 128), 1)   # broadcast over rows
    out = vp_ref[...]
    col = col_ref[...]
    for j in range(rpb):  # static unroll; rpb <= 16 on this path
        out = jnp.where(lane == (j * p + idx), col[:, j:j + 1], out)
    out_ref[...] = out


def _scatter_col_plain_kernel(vp_ref, col_ref, out_ref, *, idx):
    """Fallback path: direct (tile_rows, P) tiles, replace lane == idx."""
    lane = jax.lax.broadcasted_iota(jnp.int32, (1, out_ref.shape[-1]), 1)
    out_ref[...] = jnp.where(lane == idx, col_ref[...], vp_ref[...])


# ----------------------------- tiling helpers -------------------------------

# ~6 MiB per vp/result tile stream: in the 2-6 MiB sweet spot for v5e/v6e and big
# enough to stay at the HBM roofline on v7x's 3.2 TB/s against ~0.35 us/step overhead.
_TARGET_TILE_BYTES = 6 << 20
_VMEM_HEADROOM_BYTES = 2 << 20


def _sublane_multiple(itemsize):
    # f32 -> 8 rows, bf16 -> 16, int8/fp8 -> 32 (native (8,128) packing per dtype).
    return max(8, 32 // max(itemsize, 1))


def _choose_tile_rows(n_rows, row_bytes, itemsize, target_bytes=_TARGET_TILE_BYTES):
    mult = _sublane_multiple(itemsize)
    tile = max(mult, target_bytes // max(row_bytes, 1))
    if tile >= n_rows:
        return n_rows  # single full block (block dim == array dim is always legal)
    return max(mult, (tile // mult) * mult)


# ----------------------------- wrapper ---------------------------------------


def update_single_vp(vp, param, idx, p_min, p_max, *, tile_rows=None):
    """vp: (N, P), param: (N,), idx: Python int column -> (result (N, P), clamped (N,)).

    `clamped` mirrors the module's in-place `param.data = clamp_range(param)`.
    """
    N, P = vp.shape
    if not (0 <= idx < P):
        raise ValueError(f"column index {idx} out of range for P={P}")

    # Clamp once in XLA; returned (param.data refresh) and fed to the kernel.
    clamped = jnp.clip(param, p_min, p_max)
    col = clamped.astype(vp.dtype)

    itemsize = jnp.dtype(vp.dtype).itemsize
    mult = _sublane_multiple(itemsize)

    # Lane-dense slab layout is valid when P divides 128 and rows pack evenly;
    # limit the static scatter unroll to 128/P <= 16 so the VPU work stays hidden
    # under the HBM DMA.
    rpb = (128 // P) if (P < 128 and 128 % P == 0) else 0
    lane_dense = rpb > 0 and rpb <= 16 and (N % rpb == 0)

    if lane_dense:
        n_rows, last, col_last = N // rpb, 128, rpb
        vp_in = vp.reshape(n_rows, 128)          # row-major -> metadata-only reshape
        col_in = col.reshape(n_rows, rpb)
        kernel = functools.partial(_scatter_col_lane_dense_kernel, idx=idx, p=P)
    else:
        n_rows, last, col_last = N, P, 1
        vp_in = vp
        col_in = col.reshape(N, 1)
        kernel = functools.partial(_scatter_col_plain_kernel, idx=idx)

    row_bytes = last * itemsize
    if tile_rows is None:
        tile_rows = _choose_tile_rows(n_rows, row_bytes, itemsize)
    tile_rows = min(int(tile_rows), n_rows)
    if tile_rows < n_rows:
        tile_rows = max(mult, (tile_rows // mult) * mult)

    grid = (pl.cdiv(n_rows, tile_rows),)

    # VMEM budget: vp-in + result-out tiles (double-buffered) + column tiles + headroom.
    tile_bytes = tile_rows * row_bytes
    col_tile_bytes = tile_rows * col_last * itemsize
    vmem_limit = 4 * tile_bytes + 2 * col_tile_bytes + _VMEM_HEADROOM_BYTES
    vmem_limit = int(min(max(vmem_limit, 4 << 20), 48 << 20))  # fits v7x's 64 MiB physical

    out = pl.pallas_call(
        kernel,
        out_shape=jax.ShapeDtypeStruct((n_rows, last), vp.dtype),
        grid=grid,
        in_specs=[
            pl.BlockSpec((tile_rows, last), lambda i: (i, 0)),       # vp tile
            pl.BlockSpec((tile_rows, col_last), lambda i: (i, 0)),   # clamped column tile
        ],
        out_specs=pl.BlockSpec((tile_rows, last), lambda i: (i, 0)),
        compiler_params=pltpu.CompilerParams(
            dimension_semantics=("parallel",),
            vmem_limit_bytes=vmem_limit,
        ),
    )(vp_in, col_in)

    if lane_dense:
        out = out.reshape(N, P)
    return out, clamped


if __name__ == "__main__":
    key = jax.random.PRNGKey(0)

    # Synthetic "vpd"/"vp" setup (glue in plain JAX):
    N, P = 128, 16                   # N view-parameter rows, P parameters per row
    name2idx = {"focal": 3}          # the optimized parameter lives in column 3
    clamp_min, clamp_max = 0.0, 1.0  # vpd.clamp_range
    p_start = 1.5                    # uniform start (out of range -> exercises clamping)

    vp = jax.random.uniform(key, (N, P), dtype=jnp.float32)
    # Parameter init: ones_like(selected column) * p_start, squeezed -> shape (N,)
    param = jnp.ones((N,), dtype=jnp.float32) * p_start

    # Lane-dense slab here is (16, 128); tile_rows=8 -> grid=(2,), exercising the
    # pipelined multi-block path on this small example (auto-sizing would pick 1 block).
    result, new_param = update_single_vp(
        vp, param, name2idx["focal"], clamp_min, clamp_max, tile_rows=8
    )
    result = jax.block_until_ready(result)
    new_param = jax.block_until_ready(new_param)

    # Reference check in plain JAX.
    ref_clamped = jnp.clip(param, clamp_min, clamp_max)
    ref_result = vp.at[:, name2idx["focal"]].set(ref_clamped)
    assert jnp.allclose(result, ref_result), "result mismatch"
    assert jnp.allclose(new_param, ref_clamped), "clamped param mismatch"

    # Also exercise the auto-sized (single-block) path once for coverage.
    result2, _ = update_single_vp(vp, param, name2idx["focal"], clamp_min, clamp_max)
    assert jnp.allclose(jax.block_until_ready(result2), ref_result), "auto-tile mismatch"

    print("KERNEL_OK")
</pallas_src>

<mosaic_0001>
module attributes {stable_mosaic.version = 11 : i64} {
  func.func @_scatter_col_lane_dense_kernel(%arg0: i32, %arg1: memref<8x128xf32, #tpu.memory_space<vmem>>, %arg2: memref<8x8xf32, #tpu.memory_space<vmem>>, %arg3: memref<8x128xf32, #tpu.memory_space<vmem>>) attributes {dimension_semantics = [#tpu.dimension_semantics<parallel>], iteration_bounds = array<i64: 2>, scalar_prefetch = 0 : i64, scratch_operands = 0 : i64, tpu.core_type = #tpu.core_type<tc>, window_params = [{transform_indices = @transform_0, window_bounds = array<i64: 8, 128>}, {transform_indices = @transform_1, window_bounds = array<i64: 8, 8>}, {transform_indices = @transform_2, window_bounds = array<i64: 8, 128>}]} {
    %0 = tpu.iota {dimensions = array<i32: 1>} : vector<1x128xi32>
    %c0 = arith.constant 0 : index
    %c0_0 = arith.constant 0 : index
    %1 = vector.load %arg1[%c0, %c0_0] : memref<8x128xf32, #tpu.memory_space<vmem>>, vector<8x128xf32>
    %c0_1 = arith.constant 0 : index
    %c0_2 = arith.constant 0 : index
    %2 = vector.load %arg2[%c0_1, %c0_2] : memref<8x8xf32, #tpu.memory_space<vmem>>, vector<8x8xf32>
    %c3_i32 = arith.constant 3 : i32
    %3 = vector.broadcast %c3_i32 : i32 to vector<1x128xi32>
    %4 = arith.cmpi eq, %0, %3 : vector<1x128xi32>
    %5 = vector.extract_strided_slice %2 {offsets = [0, 0], sizes = [8, 1], strides = [1, 1]} : vector<8x8xf32> to vector<8x1xf32>
    %6 = vector.shape_cast %4 : vector<1x128xi1> to vector<1x128xi1>
    %7 = vector.broadcast %6 : vector<1x128xi1> to vector<8x128xi1>
    %8 = vector.shape_cast %5 : vector<8x1xf32> to vector<8x1xf32>
    %9 = vector.broadcast %8 : vector<8x1xf32> to vector<8x128xf32>
    %10 = arith.select %7, %9, %1 : vector<8x128xi1>, vector<8x128xf32>
    %c19_i32 = arith.constant 19 : i32
    %11 = vector.broadcast %c19_i32 : i32 to vector<1x128xi32>
    %12 = arith.cmpi eq, %0, %11 : vector<1x128xi32>
    %13 = vector.extract_strided_slice %2 {offsets = [0, 1], sizes = [8, 1], strides = [1, 1]} : vector<8x8xf32> to vector<8x1xf32>
    %14 = vector.shape_cast %12 : vector<1x128xi1> to vector<1x128xi1>
    %15 = vector.broadcast %14 : vector<1x128xi1> to vector<8x128xi1>
    %16 = vector.shape_cast %13 : vector<8x1xf32> to vector<8x1xf32>
    %17 = vector.broadcast %16 : vector<8x1xf32> to vector<8x128xf32>
    %18 = arith.select %15, %17, %10 : vector<8x128xi1>, vector<8x128xf32>
    %c35_i32 = arith.constant 35 : i32
    %19 = vector.broadcast %c35_i32 : i32 to vector<1x128xi32>
    %20 = arith.cmpi eq, %0, %19 : vector<1x128xi32>
    %21 = vector.extract_strided_slice %2 {offsets = [0, 2], sizes = [8, 1], strides = [1, 1]} : vector<8x8xf32> to vector<8x1xf32>
    %22 = vector.shape_cast %20 : vector<1x128xi1> to vector<1x128xi1>
    %23 = vector.broadcast %22 : vector<1x128xi1> to vector<8x128xi1>
    %24 = vector.shape_cast %21 : vector<8x1xf32> to vector<8x1xf32>
    %25 = vector.broadcast %24 : vector<8x1xf32> to vector<8x128xf32>
    %26 = arith.select %23, %25, %18 : vector<8x128xi1>, vector<8x128xf32>
    %c51_i32 = arith.constant 51 : i32
    %27 = vector.broadcast %c51_i32 : i32 to vector<1x128xi32>
    %28 = arith.cmpi eq, %0, %27 : vector<1x128xi32>
    %29 = vector.extract_strided_slice %2 {offsets = [0, 3], sizes = [8, 1], strides = [1, 1]} : vector<8x8xf32> to vector<8x1xf32>
    %30 = vector.shape_cast %28 : vector<1x128xi1> to vector<1x128xi1>
    %31 = vector.broadcast %30 : vector<1x128xi1> to vector<8x128xi1>
    %32 = vector.shape_cast %29 : vector<8x1xf32> to vector<8x1xf32>
    %33 = vector.broadcast %32 : vector<8x1xf32> to vector<8x128xf32>
    %34 = arith.select %31, %33, %26 : vector<8x128xi1>, vector<8x128xf32>
    %c67_i32 = arith.constant 67 : i32
    %35 = vector.broadcast %c67_i32 : i32 to vector<1x128xi32>
    %36 = arith.cmpi eq, %0, %35 : vector<1x128xi32>
    %37 = vector.extract_strided_slice %2 {offsets = [0, 4], sizes = [8, 1], strides = [1, 1]} : vector<8x8xf32> to vector<8x1xf32>
    %38 = vector.shape_cast %36 : vector<1x128xi1> to vector<1x128xi1>
    %39 = vector.broadcast %38 : vector<1x128xi1> to vector<8x128xi1>
    %40 = vector.shape_cast %37 : vector<8x1xf32> to vector<8x1xf32>
    %41 = vector.broadcast %40 : vector<8x1xf32> to vector<8x128xf32>
    %42 = arith.select %39, %41, %34 : vector<8x128xi1>, vector<8x128xf32>
    %c83_i32 = arith.constant 83 : i32
    %43 = vector.broadcast %c83_i32 : i32 to vector<1x128xi32>
    %44 = arith.cmpi eq, %0, %43 : vector<1x128xi32>
    %45 = vector.extract_strided_slice %2 {offsets = [0, 5], sizes = [8, 1], strides = [1, 1]} : vector<8x8xf32> to vector<8x1xf32>
    %46 = vector.shape_cast %44 : vector<1x128xi1> to vector<1x128xi1>
    %47 = vector.broadcast %46 : vector<1x128xi1> to vector<8x128xi1>
    %48 = vector.shape_cast %45 : vector<8x1xf32> to vector<8x1xf32>
    %49 = vector.broadcast %48 : vector<8x1xf32> to vector<8x128xf32>
    %50 = arith.select %47, %49, %42 : vector<8x128xi1>, vector<8x128xf32>
    %c99_i32 = arith.constant 99 : i32
    %51 = vector.broadcast %c99_i32 : i32 to vector<1x128xi32>
    %52 = arith.cmpi eq, %0, %51 : vector<1x128xi32>
    %53 = vector.extract_strided_slice %2 {offsets = [0, 6], sizes = [8, 1], strides = [1, 1]} : vector<8x8xf32> to vector<8x1xf32>
    %54 = vector.shape_cast %52 : vector<1x128xi1> to vector<1x128xi1>
    %55 = vector.broadcast %54 : vector<1x128xi1> to vector<8x128xi1>
    %56 = vector.shape_cast %53 : vector<8x1xf32> to vector<8x1xf32>
    %57 = vector.broadcast %56 : vector<8x1xf32> to vector<8x128xf32>
    %58 = arith.select %55, %57, %50 : vector<8x128xi1>, vector<8x128xf32>
    %c115_i32 = arith.constant 115 : i32
    %59 = vector.broadcast %c115_i32 : i32 to vector<1x128xi32>
    %60 = arith.cmpi eq, %0, %59 : vector<1x128xi32>
    %61 = vector.extract_strided_slice %2 {offsets = [0, 7], sizes = [8, 1], strides = [1, 1]} : vector<8x8xf32> to vector<8x1xf32>
    %62 = vector.shape_cast %60 : vector<1x128xi1> to vector<1x128xi1>
    %63 = vector.broadcast %62 : vector<1x128xi1> to vector<8x128xi1>
    %64 = vector.shape_cast %61 : vector<8x1xf32> to vector<8x1xf32>
    %65 = vector.broadcast %64 : vector<8x1xf32> to vector<8x128xf32>
    %66 = arith.select %63, %65, %58 : vector<8x128xi1>, vector<8x128xf32>
    %c0_3 = arith.constant 0 : index
    %c0_4 = arith.constant 0 : index
    %67 = vector.load %arg3[%c0_3, %c0_4] : memref<8x128xf32, #tpu.memory_space<vmem>>, vector<8x128xf32>
    tpu.vector_store %arg3[%c0_3, %c0_4], %66 {strides = array<i32>} : memref<8x128xf32, #tpu.memory_space<vmem>>, vector<8x128xf32>,
    return
  }
  func.func @transform_0(%arg0: i32) -> (i32, i32) {
    %c0_i32 = arith.constant 0 : i32
    %c0_i32_0 = arith.constant 0 : i32
    return %arg0, %c0_i32 : i32, i32
  }
  func.func @transform_1(%arg0: i32) -> (i32, i32) {
    %c0_i32 = arith.constant 0 : i32
    %c0_i32_0 = arith.constant 0 : i32
    return %arg0, %c0_i32 : i32, i32
  }
  func.func @transform_2(%arg0: i32) -> (i32, i32) {
    %c0_i32 = arith.constant 0 : i32
    %c0_i32_0 = arith.constant 0 : i32
    return %arg0, %c0_i32 : i32, i32
  }
}

</mosaic_0001>

<llo_original>
// kernel: tpu_custom_call.1
$region0: #{tpu_custom_call.1}
  #allocation0 [shape = 'u32[]', space=smem, size = 0x4, offset = 0x4, fixed_abs, tag = 'smem constant byte address 0x4 - core index']
  #allocation1 [shape = 'u32[144,128]{1,0:T(1,128)}', space=vmem, size = 0x12000, scoped, tag = 'internal scratch']
  %s0 = inlined_call_operand.vmem [shape: f32[16,128], index: 0, kind: input, shape index: {}]
  %s1 = inlined_call_operand.vmem [shape: f32[16,8], index: 1, kind: input, shape index: {}]
  %s2 = inlined_call_operand.hbm [shape: f32[16,128], index: 2, kind: output, shape index: {}]
  %s3 = sld [smem:[#allocation0]]
  $region41: #{tpu_custom_call.1} parent=0
    _
  %s5 = ssub.s32 1, %s3
  %s6 = scalar_select 0, %s5, %s3
  $region1: #{tpu_custom_call.1} parent=0
    #allocation2 [shape = 'u8[8192]{0}', space=vmem, size = 0x2000, scoped, tag = 'output window, operand 0']
    #allocation3 [shape = 's32[2]{0}', space=sflag, size = 0x8, scoped, tag = 'scoped memory for tpu_custom_call.1']
    %7 = vsyncpa [#allocation3], 0
    %s8 = scalar_lea.sflag [#allocation3], 1
    %9 = vsyncpa %s8, 0
    loop: start=0, step=1, limit=4
    $region2: #{tpu_custom_call.1} parent=1 // loop_pre_header
      _
    $region3: #{tpu_custom_call.1} parent=1 // loop_header
      %s11 = sphi 0, %s15
      %p12 = scmp.ge.s32.totalorder %s11, 4
      %s21 = sphi 0, %s23
      %s24 = sphi 0, %s21
      %s25 = sphi 0, %s24
      %s41 = sphi 0, %s25
      %s47 = sphi 0, %s49
      %s50 = sphi 0, %s47
      %s51 = sphi 0, %s50
      %s67 = sphi 0, %s51
      %s73 = sphi 0, %s75
      %s76 = sphi 0, %s73
      %s77 = sphi 0, %s76
      %s93 = sphi 0, %s77
    $region4: #{tpu_custom_call.1} parent=1 // loop_header_branch
      %14 = sbr.rel (%p12) target = $region8
    $region5: #{tpu_custom_call.1} parent=1 // loop_body
      %s16 = ssub.s32 %s11, 1
      %s17 = ssub.s32 %s11, 2
      %s18 = sadd.s32 %s11, 1
      %s19 = ssub.s32 %s11, %s18
      %p20 = scmp.eq.s32.totalorder %s19, 0
      %s22 = sadd.s32 %s21, 1
      %s23 = scalar_select %p20, %s21, %s22
      %p26 = pneg %p20
      %p27 = scmp.eq.s32.totalorder %s11, 1
      %p28 = por %p26, %p27
      %p29 = scmp.ne.s32.totalorder %s21, %s24
      %p30 = scmp.eq.s32.totalorder %s11, 0
      %p31 = por %p29, %p30
      %p32 = scmp.ne.s32.totalorder %s21, %s24
      %p33 = scmp.eq.s32.totalorder %s16, 1
      %p34 = por %p32, %p33
      %p35 = scmp.ne.s32.totalorder %s24, %s25
      %p36 = scmp.eq.s32.totalorder %s16, 0
      %p37 = por %p35, %p36
      %p38 = scmp.ne.s32.totalorder %s24, %s25
      %p39 = scmp.eq.s32.totalorder %s17, 1
      %p40 = por %p38, %p39
      %p42 = scmp.ne.s32.totalorder %s25, %s41
      %p43 = scmp.eq.s32.totalorder %s17, 0
      %p44 = por %p42, %p43
      %s45 = ssub.s32 %s11, %s18
      %p46 = scmp.eq.s32.totalorder %s45, 0
      %s48 = sadd.s32 %s47, 1
      %s49 = scalar_select %p46, %s47, %s48
      %p52 = pneg %p46
      %p53 = scmp.eq.s32.totalorder %s11, 1
      %p54 = por %p52, %p53
      %p55 = scmp.ne.s32.totalorder %s47, %s50
      %p56 = scmp.eq.s32.totalorder %s11, 0
      %p57 = por %p55, %p56
      %p58 = scmp.ne.s32.totalorder %s47, %s50
      %p59 = scmp.eq.s32.totalorder %s16, 1
      %p60 = por %p58, %p59
      %p61 = scmp.ne.s32.totalorder %s50, %s51
      %p62 = scmp.eq.s32.totalorder %s16, 0
      %p63 = por %p61, %p62
      %p64 = scmp.ne.s32.totalorder %s50, %s51
      %p65 = scmp.eq.s32.totalorder %s17, 1
      %p66 = por %p64, %p65
      %p68 = scmp.ne.s32.totalorder %s51, %s67
      %p69 = scmp.eq.s32.totalorder %s17, 0
      %p70 = por %p68, %p69
      %s71 = ssub.s32 %s11, %s18
      %p72 = scmp.eq.s32.totalorder %s71, 0
      %s74 = sadd.s32 %s73, 1
      %s75 = scalar_select %p72, %s73, %s74
      %p78 = pneg %p72
      %p79 = scmp.eq.s32.totalorder %s11, 1
      %p80 = por %p78, %p79
      %p81 = scmp.ne.s32.totalorder %s73, %s76
      %p82 = scmp.eq.s32.totalorder %s11, 0
      %p83 = por %p81, %p82
      %p84 = scmp.ne.s32.totalorder %s73, %s76
      %p85 = scmp.eq.s32.totalorder %s16, 1
      %p86 = por %p84, %p85
      %p87 = scmp.ne.s32.totalorder %s76, %s77
      %p88 = scmp.eq.s32.totalorder %s16, 0
      %p89 = por %p87, %p88
      %p90 = scmp.ne.s32.totalorder %s76, %s77
      %p91 = scmp.eq.s32.totalorder %s17, 1
      %p92 = por %p90, %p91
      %p94 = scmp.ne.s32.totalorder %s77, %s93
      %p95 = scmp.eq.s32.totalorder %s17, 0
      %p96 = por %p94, %p95
      %p97 = scmp.le.s32.totalorder 1, %s11
      %p98 = scmp.lt.s32.totalorder %s11, 3
      %p99 = pnand %p97, %p98
      %p100 = pneg %p99
      // Predicated region
      $region9: #{tpu_custom_call.1} parent=5 // pred_check
        _
      $region10: #{tpu_custom_call.1} parent=5 // pred_check_branch
        %102 = sbr.rel (%p99) target = $region12
      $region11: #{tpu_custom_call.1} parent=5 // pred_region
        %s103 = ssub.s32 %s11, 1
      $region12: #{tpu_custom_call.1} parent=5 // pred_fallthru
        _
      %p104 = scmp.lt.s32.totalorder %s11, 2
      // Predicated region
      $region13: #{tpu_custom_call.1} parent=5 // pred_check
        %p105 = pneg %p104
      $region14: #{tpu_custom_call.1} parent=5 // pred_check_branch
        %107 = sbr.rel (%p105) target = $region16
      $region15: #{tpu_custom_call.1} parent=5 // pred_region
        // Predicated region
        $region17: #{tpu_custom_call.1} parent=15 // pred_check
          %p108 = pneg %p31
        $region18: #{tpu_custom_call.1} parent=15 // pred_check_branch
          %110 = sbr.rel (%p108) target = $region20
        $region19: #{tpu_custom_call.1} parent=15 // pred_region
          %p111 = scmp.lt.s32.totalorder %s11, 1
          %s112 = scalar_select %p111, %s11, 1
          %s113 = smul.addr %s112, 8
          %s114 = scalar_lea.vmem %s0, %s113
        $region20: #{tpu_custom_call.1} parent=15 // pred_fallthru
          _
        // Predicated region
        $region21: #{tpu_custom_call.1} parent=15 // pred_check
          %p115 = pneg %p57
        $region22: #{tpu_custom_call.1} parent=15 // pred_check_branch
          %117 = sbr.rel (%p115) target = $region24
        $region23: #{tpu_custom_call.1} parent=15 // pred_region
          %p118 = scmp.lt.s32.totalorder %s11, 1
          %s119 = scalar_select %p118, %s11, 1
          %s120 = smul.addr %s119, 8
          %s121 = scalar_lea.vmem %s1, %s120
        $region24: #{tpu_custom_call.1} parent=15 // pred_fallthru
          _
      $region16: #{tpu_custom_call.1} parent=5 // pred_fallthru
        _
      %p122 = scmp.le.s32.totalorder 1, %s11
      %p123 = scmp.lt.s32.totalorder %s11, 3
      %p124 = pnand %p122, %p123
      %p125 = pneg %p124
      // Predicated region
      $region25: #{tpu_custom_call.1} parent=5 // pred_check
        _
      $region26: #{tpu_custom_call.1} parent=5 // pred_check_branch
        %127 = sbr.rel (%p124) target = $region28
      $region27: #{tpu_custom_call.1} parent=5 // pred_region
        %s128 = ssub.s32 %s11, 1
        %p129 = scmp.lt.s32.totalorder %s16, 1
        %s130 = scalar_select %p129, %s16, 1
        %s131 = smul.addr %s130, 8
        %s132 = scalar_lea.vmem %s0, %s131
        %p133 = pneg %p37
        %p134 = pneg %p34
        %p135 = scmp.lt.s32.totalorder %s16, 1
        %s136 = scalar_select %p135, %s16, 1
        %s137 = smul.addr %s136, 8
        %s138 = scalar_lea.vmem %s1, %s137
        %p139 = pneg %p63
        %p140 = pneg %p60
        %p141 = pneg %p89
        %p142 = pneg %p86
        %s143 = sand.u32 %s76, 1
        %s144 = scalar_lea.sflag [#allocation3], %s143
        %s145 = sand.u32 %s76, 1
        %s146 = smul.addr %s145, 8
        %s147 = scalar_lea.vmem [#allocation2], %s146
        %p148 = scmp.lt.s32.totalorder %s16, 1
        %s149 = scalar_select %p148, %s16, 1
        %s150 = smul.addr %s149, 8
        %s151 = scalar_lea.vmem %s0, %s150
        %p152 = scmp.lt.s32.totalorder %s16, 1
        %s153 = scalar_select %p152, %s16, 1
        %s154 = smul.addr %s153, 8
        %s155 = scalar_lea.vmem %s1, %s154
        %v156 = vlaneseq
        %v157 = vand.u32 %v156, 127
        %v158 = vld [vmem:[%s151] sm:$0xff]
        %v159 = vld [vmem:[%s155] sm:$0xff]
        %vm160 = vcmp.eq.s32.totalorder %v157, 3
        %v161 = vsel %vm160, 1, 0
        %vm162 = vcmp.eq.s32.totalorder %v161, 1
        %164 = vset.pattern.permute.xlu0 0
        %165 = vperm.xlu0 %164, %v159
        %v166 = vpop.permute.xlu0 %165
        %v168 = vsel %vm162, %v166, %v158
        %vm169 = vcmp.eq.s32.totalorder %v157, 19
        %v170 = vsel %vm169, 1, 0
        %vm171 = vcmp.eq.s32.totalorder %v170, 1
        %172 = vset.pattern.permute.xlu0 1
        %173 = vperm.xlu0 %172, %v159
        %v174 = vpop.permute.xlu0 %173
        %v176 = vsel %vm171, %v174, %v168
        %vm177 = vcmp.eq.s32.totalorder %v157, 35
        %v178 = vsel %vm177, 1, 0
        %vm179 = vcmp.eq.s32.totalorder %v178, 1
        %180 = vset.pattern.permute.xlu0 2
        %181 = vperm.xlu0 %180, %v159
        %v182 = vpop.permute.xlu0 %181
        %v184 = vsel %vm179, %v182, %v176
        %vm185 = vcmp.eq.s32.totalorder %v157, 51
        %v186 = vsel %vm185, 1, 0
        %vm187 = vcmp.eq.s32.totalorder %v186, 1
        %188 = vset.pattern.permute.xlu0 3
        %189 = vperm.xlu0 %188, %v159
        %v190 = vpop.permute.xlu0 %189
        %v192 = vsel %vm187, %v190, %v184
        %vm193 = vcmp.eq.s32.totalorder %v157, 67
        %v194 = vsel %vm193, 1, 0
        %vm195 = vcmp.eq.s32.totalorder %v194, 1
        %196 = vset.pattern.permute.xlu0 4
        %197 = vperm.xlu0 %196, %v159
        %v198 = vpop.permute.xlu0 %197
        %v200 = vsel %vm195, %v198, %v192
        %vm201 = vcmp.eq.s32.totalorder %v157, 83
        %v202 = vsel %vm201, 1, 0
        %vm203 = vcmp.eq.s32.totalorder %v202, 1
        %204 = vset.pattern.permute.xlu0 5
        %205 = vperm.xlu0 %204, %v159
        %v206 = vpop.permute.xlu0 %205
        %v208 = vsel %vm203, %v206, %v200
        %vm209 = vcmp.eq.s32.totalorder %v157, 99
        %v210 = vsel %vm209, 1, 0
        %vm211 = vcmp.eq.s32.totalorder %v210, 1
        %212 = vset.pattern.permute.xlu0 6
        %213 = vperm.xlu0 %212, %v159
        %v214 = vpop.permute.xlu0 %213
        %v216 = vsel %vm211, %v214, %v208
        %vm217 = vcmp.eq.s32.totalorder %v157, 115
        %v218 = vsel %vm217, 1, 0
        %vm219 = vcmp.eq.s32.totalorder %v218, 1
        %220 = vset.pattern.permute.xlu0 7
        %221 = vperm.xlu0 %220, %v159
        %v222 = vpop.permute.xlu0 %221
        %v224 = vsel %vm219, %v222, %v216
        %225 = vst [vmem:[%s147] sm:$0xff] %v224
        %s226 = sand.u32 %s76, 1
        %s227 = scalar_lea.sflag [#allocation3], %s226
        %s228 = sand.u32 %s76, 1
        %s229 = smul.addr %s228, 8
        %s230 = scalar_lea.vmem [#allocation2], %s229
        // Predicated region
        $region29: #{tpu_custom_call.1} parent=27 // pred_check
          %p231 = pneg %p86
        $region30: #{tpu_custom_call.1} parent=27 // pred_check_branch
          %233 = sbr.rel (%p231) target = $region32
        $region31: #{tpu_custom_call.1} parent=27 // pred_region
          %s235 = ssub.s32 128, 128
          %236 = vsyncadd %s227, %s235
          %s237 = smul.addr %s16, 128
          %s238 = scalar_lea.hbm %s2, %s237
          %s240 = sshll.u32 %s230, 4
          %s241 = int_to_ptr.vmem [resolvable:$true] %s240
          %243 = dma.vmem_to_hbm [thread:$0]  %s241, 128, %s238, %s227
        $region32: #{tpu_custom_call.1} parent=27 // pred_fallthru
          _
      $region28: #{tpu_custom_call.1} parent=5 // pred_fallthru
        _
      %p244 = scmp.le.s32.totalorder 2, %s11
      // Predicated region
      $region33: #{tpu_custom_call.1} parent=5 // pred_check
        %p245 = pneg %p244
      $region34: #{tpu_custom_call.1} parent=5 // pred_check_branch
        %247 = sbr.rel (%p245) target = $region36
      $region35: #{tpu_custom_call.1} parent=5 // pred_region
        %s248 = ssub.s32 %s11, 2
        // Predicated region
        $region37: #{tpu_custom_call.1} parent=35 // pred_check
          %p249 = pneg %p92
        $region38: #{tpu_custom_call.1} parent=35 // pred_check_branch
          %251 = sbr.rel (%p249) target = $region40
        $region39: #{tpu_custom_call.1} parent=35 // pred_region
          %s252 = sand.u32 %s77, 1
          %s253 = scalar_lea.sflag [#allocation3], %s252
          %s254 = sand.u32 %s77, 1
          %s255 = smul.addr %s254, 8
          %s256 = scalar_lea.vmem [#allocation2], %s255
          %257 = dma.done %s253, 128
        $region40: #{tpu_custom_call.1} parent=35 // pred_fallthru
          _
      $region36: #{tpu_custom_call.1} parent=5 // pred_fallthru
        _
    $region6: #{tpu_custom_call.1} parent=1 // loop_footer
      %s15 = sadd.s32 1, %s11
    $region7: #{tpu_custom_call.1} parent=1 // loop_footer_branch
      %10 = sbr.rel target = $region3
    $region8: #{tpu_custom_call.1} parent=1 // loop_exit
      _
    %258 = vsyncpa [#allocation3], 1
    %s259 = scalar_lea.sflag [#allocation3], 1
    %260 = vsyncpa %s259, 1

</llo_original>
